<compile_context>
chip_gen: v7x
topology: tpu7x:2x2x1
jax: 0.10.0
libtpu: 0.0.40
codegen_flags: <defaults>
</compile_context>

<pallas_src>
import jax
import jax.numpy as jnp
import jax.scipy.special as jsp
from jax import lax
from jax.experimental import pallas as pl
from jax.experimental.pallas import tpu as pltpu

MATMUL_DTYPE = jnp.bfloat16   # MXU-native on v5e/v6e/v7x; elementwise stays f32


def _round_up(x, m):
    return ((x + m - 1) // m) * m


def _num_tensorcores():
    """Best-effort TensorCores-per-chip detection (v7x: 2, v5e/v6e: 1)."""
    try:
        kind = (jax.devices()[0].device_kind or "").lower()
        if "v7" in kind:
            return 2
    except Exception:
        pass
    return 1


def _softplus(x):
    # softplus(x) = max(x,0) + log1p(exp(-|x|)) -> numerically stable, VPU/EUP only.
    return jnp.maximum(x, 0.0) + jnp.log1p(jnp.exp(-jnp.abs(x)))


# --------------------------------------------------------------------------- kernel
def _make_fused_mlp_kernel(n_layers, head_cols):
    """Fused joint-MLP forward.

    refs = (x, W0, b0, W1, b1, ..., W_{n-1}, b_{n-1}, out)
    Layers 0..n-2: ReLU.  Layer n-1 (narrow, lane-padded):
        out[:, :head_cols]            = softplus(z) + 1   (Beta alpha/beta heads)
        out[:, head_cols]             = z                  (critic q-value)
    """
    def kernel(*refs):
        out_ref = refs[-1]
        h = refs[0][...].astype(jnp.float32)
        for l in range(n_layers):
            w = refs[1 + 2 * l][...]                # bf16 weight (pre-cast in wrapper)
            b = refs[2 + 2 * l][...]                # f32 bias [1, out]
            z = jnp.dot(h.astype(MATMUL_DTYPE), w,
                        preferred_element_type=jnp.float32) + b
            if l < n_layers - 1:
                h = jnp.maximum(z, 0.0)
            else:
                col = lax.broadcasted_iota(jnp.int32, z.shape, 1)
                out_ref[...] = jnp.where(col < head_cols, _softplus(z) + 1.0, z)
    return kernel


# ---------------------------------------------------------------- joint weight prep
def _build_joint_layers(params, state_size, action_size):
    """Pack actor trunk + critic trunk into block-diagonal joint layers, plus a
    fused narrow final layer holding the two actor heads and the critic output."""
    S, A = state_size, action_size
    actor_hidden = params["actor_hidden"]          # [(W[in,out], b[out]), ...]
    wh, bh = params["actor_head"]                  # [hidden2, 2*out], [2*out]
    critic_hidden = params["critic_hidden"]        # first W is [S+A, Hc]
    wq, bq = params["critic_out"]                  # [Hc, 1], [1]

    da, dc = len(actor_hidden), len(critic_hidden)
    D = max(da, dc)

    def a_layer(d, prev):
        if d < da:
            w, b = actor_hidden[d]
            return w.astype(jnp.float32), b.reshape(1, -1).astype(jnp.float32)
        return jnp.eye(prev, dtype=jnp.float32), jnp.zeros((1, prev), jnp.float32)

    def c_layer(d, prev):
        if d < dc:
            w, b = critic_hidden[d]
            return w.astype(jnp.float32), b.reshape(1, -1).astype(jnp.float32)
        return jnp.eye(prev, dtype=jnp.float32), jnp.zeros((1, prev), jnp.float32)

    layers = []

    # depth 0: one shared input [states | actions]; actor weight rows zero-padded.
    wa0, ba0 = a_layer(0, None)                    # [S, Ha0]
    wc0, bc0 = c_layer(0, None)                    # [S+A, Hc0]
    wa0_pad = jnp.zeros((S + A, wa0.shape[1]), jnp.float32).at[:S, :].set(wa0)
    layers.append((jnp.concatenate([wa0_pad, wc0], axis=1),
                   jnp.concatenate([ba0, bc0], axis=1)))
    ha, hc = int(wa0.shape[1]), int(wc0.shape[1])

    # remaining shared depths: block-diagonal (identity carry for the shorter trunk).
    for d in range(1, D):
        wa, ba = a_layer(d, ha)
        wc, bc = c_layer(d, hc)
        na, ncol = int(wa.shape[1]), int(wc.shape[1])
        W = jnp.zeros((ha + hc, na + ncol), jnp.float32)
        W = W.at[:ha, :na].set(wa)
        W = W.at[ha:, na:].set(wc)
        layers.append((W, jnp.concatenate([ba, bc], axis=1)))
        ha, hc = na, ncol

    # fused narrow final layer: actor heads (cols 0..head_cols-1) + critic q (col head_cols)
    head_cols = int(wh.shape[1])
    out_w = max(8, _round_up(head_cols + 1, 8))
    Wf = jnp.zeros((ha + hc, out_w), jnp.float32)
    Wf = Wf.at[:ha, :head_cols].set(wh.astype(jnp.float32))
    Wf = Wf.at[ha:, head_cols:head_cols + 1].set(wq.astype(jnp.float32))
    bf = jnp.zeros((1, out_w), jnp.float32)
    bf = bf.at[:, :head_cols].set(bh.reshape(1, -1).astype(jnp.float32))
    bf = bf.at[:, head_cols:head_cols + 1].set(bq.reshape(1, -1).astype(jnp.float32))
    layers.append((Wf, bf))
    return layers, head_cols, out_w


# --------------------------------------------------------------------------- wrapper
def actor_critic_forward(states, actions, params):
    """Single fused pallas_call. Returns (head [B, 2*out], q [B, 1])."""
    states = states.astype(jnp.float32)
    actions = actions.astype(jnp.float32)
    B, S = states.shape
    A = actions.shape[1]

    x = jnp.concatenate([states, actions], axis=1)          # [B, S+A] shared input

    layers, head_cols, out_w = _build_joint_layers(params, S, A)
    n_layers = len(layers)

    # pre-cast weights to bf16 once (MXU-native, halves weight DMA); biases stay f32
    flat = []
    for w, b in layers:
        flat += [w.astype(MATMUL_DTYPE), b]

    # generation-aware batch strategy
    n_tc = _num_tensorcores()
    if n_tc >= 2:
        use_grid = B >= 512            # use both TensorCores from mid-size batches
    else:
        use_grid = B > 4096            # single TC + 128 MiB VMEM: prefer gridless

    if use_grid:
        tile = 2048 if n_tc < 2 else min(1024, _round_up(-(-B // 2), 8))
        tile = max(tile, 8)
        Bp = _round_up(B, tile)
        x_k = jnp.pad(x, ((0, Bp - B), (0, 0))) if Bp != B else x
    else:
        tile, Bp, x_k = B, B, x

    # advisory cost estimate so XLA schedules the custom call tightly vs. the glue
    flops = 2 * int(Bp) * sum(int(w.shape[0]) * int(w.shape[1]) for w, _ in layers)
    bytes_accessed = (int(x_k.size) * 4 + int(Bp) * out_w * 4
                      + sum(int(t.size) * int(t.dtype.itemsize) for t in flat))
    cost = pl.CostEstimate(flops=flops,
                           transcendentals=2 * int(Bp) * head_cols,
                           bytes_accessed=bytes_accessed)

    kernel = _make_fused_mlp_kernel(n_layers, head_cols)
    out_shape = jax.ShapeDtypeStruct((Bp, out_w), jnp.float32)

    if use_grid:
        # batch-tiled, megacore-parallel path; weights use constant index maps so they
        # stay VMEM-resident (no re-DMA) across grid steps.
        grid = (Bp // tile,)
        in_specs = [pl.BlockSpec((tile, x_k.shape[1]), lambda i: (i, 0))]
        in_specs += [pl.BlockSpec(t.shape, lambda i: (0, 0)) for t in flat]
        out_specs = pl.BlockSpec((tile, out_w), lambda i: (i, 0))
        out = pl.pallas_call(
            kernel,
            out_shape=out_shape,
            grid=grid,
            in_specs=in_specs,
            out_specs=out_specs,
            compiler_params=pltpu.CompilerParams(
                dimension_semantics=("parallel",)),
            cost_estimate=cost,
        )(x_k, *flat)
    else:
        # gridless: whole working set resident in VMEM, no pipeline machinery.
        vmem = pl.BlockSpec(memory_space=pltpu.MemorySpace.VMEM)
        out = pl.pallas_call(
            kernel,
            out_shape=out_shape,
            in_specs=[vmem] * (1 + len(flat)),
            out_specs=vmem,
            cost_estimate=cost,
        )(x_k, *flat)

    head = out[:B, :head_cols]
    q = out[:B, head_cols:head_cols + 1]
    return head, q


# ----------------------------------------------------------------------------- params
def _linear_init(key, fan_in, fan_out):
    # torch.nn.Linear default: U(-1/sqrt(fan_in), 1/sqrt(fan_in)).
    kw, kb = jax.random.split(key)
    bound = float(fan_in) ** -0.5
    w = jax.random.uniform(kw, (fan_in, fan_out), jnp.float32, -bound, bound)
    b = jax.random.uniform(kb, (fan_out,), jnp.float32, -bound, bound)
    return w, b


def init_actor_critic_params(key, state_size, hidden_size, num_layers,
                             hidden_size_2, num_layers_2, output_size,
                             action_size, critics_hidden_size, critics_num_layers):
    keys = jax.random.split(key, 64)
    k = iter(keys)

    # actor trunk (all ReLU)
    actor_hidden = []
    dims = [state_size] + [hidden_size] * num_layers + [hidden_size_2] * num_layers_2
    for d_in, d_out in zip(dims[:-1], dims[1:]):
        actor_hidden.append(_linear_init(next(k), d_in, d_out))

    # two heads (sa, acc) fused column-wise: equivalent to two Linear(hidden2, out)
    w_sa, b_sa = _linear_init(next(k), dims[-1], output_size)
    w_acc, b_acc = _linear_init(next(k), dims[-1], output_size)
    actor_head = (jnp.concatenate([w_sa, w_acc], axis=1),
                  jnp.concatenate([b_sa, b_acc], axis=0))

    # critic: L ReLU hidden layers + Linear(H, 1)
    critic_hidden = []
    cdims = [state_size + action_size] + [critics_hidden_size] * critics_num_layers
    for d_in, d_out in zip(cdims[:-1], cdims[1:]):
        critic_hidden.append(_linear_init(next(k), d_in, d_out))
    critic_out = _linear_init(next(k), cdims[-1], 1)

    return {"actor_hidden": actor_hidden, "actor_head": actor_head,
            "critic_hidden": critic_hidden, "critic_out": critic_out}


# --------------------------------------------------------------------------- evaluate
def _beta_log_prob(a, b, x):
    return ((a - 1.0) * jnp.log(x) + (b - 1.0) * jnp.log1p(-x)
            + jsp.gammaln(a + b) - jsp.gammaln(a) - jsp.gammaln(b))


def _beta_entropy(a, b):
    dg = jsp.digamma
    return (jsp.gammaln(a) + jsp.gammaln(b) - jsp.gammaln(a + b)
            - (a - 1.0) * dg(a) - (b - 1.0) * dg(b) + (a + b - 2.0) * dg(a + b))


@jax.jit
def evaluate(states, actions, params):
    """Mirror of MLPActorCritic.evaluate(states, actions), fully under one jit."""
    head, q_value = actor_critic_forward(states, actions, params)
    out = head.shape[1] // 2
    ba_sa = head[:, :out]       # (alpha, beta) steering head
    ba_acc = head[:, out:]      # (alpha, beta) acceleration head

    # NOTE: actions exactly at +/-1 map to x in {0,1} -> -inf log-prob (same as torch).
    sa_x = (actions[:, 0] + 1.0) / 2.0
    acc_x = (actions[:, 1] + 1.0) / 2.0

    sa_lp = _beta_log_prob(ba_sa[:, 0], ba_sa[:, 1], sa_x)
    acc_lp = _beta_log_prob(ba_acc[:, 0], ba_acc[:, 1], acc_x)
    sa_ent = _beta_entropy(ba_sa[:, 0], ba_sa[:, 1])
    acc_ent = _beta_entropy(ba_acc[:, 0], ba_acc[:, 1])

    logprobs = jnp.stack([sa_lp, acc_lp], axis=1)          # [B, 2]
    dist_entropy = jnp.stack([sa_ent, acc_ent], axis=1)    # [B, 2]
    return logprobs, dist_entropy, q_value

# TODO(synk): the act() path draws samples from a Beta distribution; stochastic
# sampling is left to host-side jax.random (no in-kernel Beta sampler implemented).


# --------------------------------------------------------------------------- references
def _ref_actor(states, params):
    h = states
    for w, b in params["actor_hidden"]:
        h = jnp.maximum(h @ w + b, 0.0)
    wh, bh = params["actor_head"]
    return jax.nn.softplus(h @ wh + bh) + 1.0


def _ref_critic(states, actions, params):
    h = jnp.concatenate([states, actions], axis=1)
    for w, b in params["critic_hidden"]:
        h = jnp.maximum(h @ w + b, 0.0)
    wq, bq = params["critic_out"]
    return h @ wq + bq


def _ref_joint_bf16(states, actions, params):
    """Pure-JAX mirror of the fused kernel's bf16-operand compute path."""
    S, A = states.shape[1], actions.shape[1]
    layers, head_cols, _ = _build_joint_layers(params, S, A)
    h = jnp.concatenate([states, actions], axis=1).astype(jnp.float32)
    n = len(layers)
    for i, (w, b) in enumerate(layers):
        z = jnp.dot(h.astype(MATMUL_DTYPE), w.astype(MATMUL_DTYPE),
                    preferred_element_type=jnp.float32) + b
        h = jnp.maximum(z, 0.0) if i < n - 1 else z
    head = jax.nn.softplus(h[:, :head_cols]) + 1.0
    q = h[:, head_cols:head_cols + 1]
    return head, q


if __name__ == "__main__":
    # Small shapes consistent with the module's constructor.
    state_size, hidden_size, num_layers = 6, 32, 2
    hidden_size_2, num_layers_2 = 32, 1
    output_size, action_size = 2, 2
    critics_hidden_size, critics_num_layers = 32, 2
    batch = 8

    key = jax.random.PRNGKey(0)
    kp, ks, ka = jax.random.split(key, 3)

    params = init_actor_critic_params(
        kp, state_size, hidden_size, num_layers, hidden_size_2, num_layers_2,
        output_size, action_size, critics_hidden_size, critics_num_layers)

    states = jax.random.normal(ks, (batch, state_size), jnp.float32)
    # actions strictly inside (-1, 1) so Beta log_prob is finite (matches sampled actions)
    actions = jax.random.uniform(ka, (batch, action_size), jnp.float32, -0.9, 0.9)

    logprobs, dist_entropy, q_value = evaluate(states, actions, params)
    jax.block_until_ready((logprobs, dist_entropy, q_value))

    # 1) tight check vs. a pure-JAX mirror of the exact bf16-operand joint compute
    head_pal, q_pal = jax.jit(actor_critic_forward)(states, actions, params)
    head_bf, q_bf = _ref_joint_bf16(states, actions, params)
    assert jnp.allclose(head_pal, head_bf, atol=1e-2, rtol=1e-2)
    assert jnp.allclose(q_pal, q_bf, atol=1e-2, rtol=1e-2)

    # 2) looser semantic check vs. the full-f32 torch-equivalent reference
    head_f32 = _ref_actor(states, params)
    q_f32 = _ref_critic(states, actions, params)
    assert jnp.allclose(head_pal, head_f32, atol=5e-2, rtol=5e-2)
    assert jnp.allclose(q_pal, q_f32, atol=5e-2, rtol=5e-2)
    assert jnp.allclose(q_value, q_f32, atol=5e-2, rtol=5e-2)

    # 3) Beta glue sanity against the f32 reference head
    sa_x = (actions[:, 0] + 1.0) / 2.0
    acc_x = (actions[:, 1] + 1.0) / 2.0
    lp_ref = jnp.stack([
        _beta_log_prob(head_f32[:, 0], head_f32[:, 1], sa_x),
        _beta_log_prob(head_f32[:, 2], head_f32[:, 3], acc_x)], axis=1)
    ent_ref = jnp.stack([
        _beta_entropy(head_f32[:, 0], head_f32[:, 1]),
        _beta_entropy(head_f32[:, 2], head_f32[:, 3])], axis=1)
    assert jnp.allclose(logprobs, lp_ref, atol=1e-1, rtol=1e-1)
    assert jnp.allclose(dist_entropy, ent_ref, atol=1e-1, rtol=1e-1)
    assert logprobs.shape == (batch, 2)
    assert dist_entropy.shape == (batch, 2)
    assert q_value.shape == (batch, 1)

    print("KERNEL_OK")
</pallas_src>

<mosaic_0001>
module attributes {stable_mosaic.version = 11 : i64} {
  func.func @kernel(%arg0: memref<8x8xf32, #tpu.memory_space<vmem>>, %arg1: memref<8x64xbf16, #tpu.memory_space<vmem>>, %arg2: memref<1x64xf32, #tpu.memory_space<vmem>>, %arg3: memref<64x64xbf16, #tpu.memory_space<vmem>>, %arg4: memref<1x64xf32, #tpu.memory_space<vmem>>, %arg5: memref<64x64xbf16, #tpu.memory_space<vmem>>, %arg6: memref<1x64xf32, #tpu.memory_space<vmem>>, %arg7: memref<64x8xbf16, #tpu.memory_space<vmem>>, %arg8: memref<1x8xf32, #tpu.memory_space<vmem>>, %arg9: memref<8x8xf32, #tpu.memory_space<vmem>>) attributes {dimension_semantics = [], scalar_prefetch = 0 : i64, scratch_operands = 0 : i64, tpu.core_type = #tpu.core_type<tc>} {
    %c0 = arith.constant 0 : index
    %c0_0 = arith.constant 0 : index
    %0 = vector.load %arg0[%c0, %c0_0] : memref<8x8xf32, #tpu.memory_space<vmem>>, vector<8x8xf32>
    %c0_1 = arith.constant 0 : index
    %c0_2 = arith.constant 0 : index
    %1 = vector.load %arg1[%c0_1, %c0_2] : memref<8x64xbf16, #tpu.memory_space<vmem>>, vector<8x64xbf16>
    %c0_3 = arith.constant 0 : index
    %c0_4 = arith.constant 0 : index
    %2 = vector.load %arg2[%c0_3, %c0_4] : memref<1x64xf32, #tpu.memory_space<vmem>>, vector<1x64xf32>
    %3 = arith.truncf %0 : vector<8x8xf32> to vector<8x8xbf16>
    %cst = arith.constant dense<0.000000e+00> : vector<8x64xf32>
    %4 = tpu.matmul %3, %1, %cst {dimension_numbers = #tpu.dot_dimension_numbers<[1], [0], [0], [1], [0, 0, 1, 1], [], []>} : vector<8x8xbf16>, vector<8x64xbf16>, vector<8x64xf32> -> vector<8x64xf32>
    %5 = vector.broadcast %2 : vector<1x64xf32> to vector<8x64xf32>
    %6 = arith.addf %4, %5 : vector<8x64xf32>
    %cst_5 = arith.constant 0.000000e+00 : f32
    %7 = vector.broadcast %cst_5 : f32 to vector<8x64xf32>
    %8 = arith.maximumf %6, %7 : vector<8x64xf32>
    %c0_6 = arith.constant 0 : index
    %c0_7 = arith.constant 0 : index
    %9 = vector.load %arg3[%c0_6, %c0_7] : memref<64x64xbf16, #tpu.memory_space<vmem>>, vector<64x64xbf16>
    %c0_8 = arith.constant 0 : index
    %c0_9 = arith.constant 0 : index
    %10 = vector.load %arg4[%c0_8, %c0_9] : memref<1x64xf32, #tpu.memory_space<vmem>>, vector<1x64xf32>
    %11 = arith.truncf %8 : vector<8x64xf32> to vector<8x64xbf16>
    %cst_10 = arith.constant dense<0.000000e+00> : vector<8x64xf32>
    %12 = tpu.matmul %11, %9, %cst_10 {dimension_numbers = #tpu.dot_dimension_numbers<[1], [0], [0], [1], [0, 0, 1, 1], [], []>} : vector<8x64xbf16>, vector<64x64xbf16>, vector<8x64xf32> -> vector<8x64xf32>
    %13 = vector.broadcast %10 : vector<1x64xf32> to vector<8x64xf32>
    %14 = arith.addf %12, %13 : vector<8x64xf32>
    %cst_11 = arith.constant 0.000000e+00 : f32
    %15 = vector.broadcast %cst_11 : f32 to vector<8x64xf32>
    %16 = arith.maximumf %14, %15 : vector<8x64xf32>
    %c0_12 = arith.constant 0 : index
    %c0_13 = arith.constant 0 : index
    %17 = vector.load %arg5[%c0_12, %c0_13] : memref<64x64xbf16, #tpu.memory_space<vmem>>, vector<64x64xbf16>
    %c0_14 = arith.constant 0 : index
    %c0_15 = arith.constant 0 : index
    %18 = vector.load %arg6[%c0_14, %c0_15] : memref<1x64xf32, #tpu.memory_space<vmem>>, vector<1x64xf32>
    %19 = arith.truncf %16 : vector<8x64xf32> to vector<8x64xbf16>
    %cst_16 = arith.constant dense<0.000000e+00> : vector<8x64xf32>
    %20 = tpu.matmul %19, %17, %cst_16 {dimension_numbers = #tpu.dot_dimension_numbers<[1], [0], [0], [1], [0, 0, 1, 1], [], []>} : vector<8x64xbf16>, vector<64x64xbf16>, vector<8x64xf32> -> vector<8x64xf32>
    %21 = vector.broadcast %18 : vector<1x64xf32> to vector<8x64xf32>
    %22 = arith.addf %20, %21 : vector<8x64xf32>
    %cst_17 = arith.constant 0.000000e+00 : f32
    %23 = vector.broadcast %cst_17 : f32 to vector<8x64xf32>
    %24 = arith.maximumf %22, %23 : vector<8x64xf32>
    %c0_18 = arith.constant 0 : index
    %c0_19 = arith.constant 0 : index
    %25 = vector.load %arg7[%c0_18, %c0_19] : memref<64x8xbf16, #tpu.memory_space<vmem>>, vector<64x8xbf16>
    %c0_20 = arith.constant 0 : index
    %c0_21 = arith.constant 0 : index
    %26 = vector.load %arg8[%c0_20, %c0_21] : memref<1x8xf32, #tpu.memory_space<vmem>>, vector<1x8xf32>
    %27 = arith.truncf %24 : vector<8x64xf32> to vector<8x64xbf16>
    %cst_22 = arith.constant dense<0.000000e+00> : vector<8x8xf32>
    %28 = tpu.matmul %27, %25, %cst_22 {dimension_numbers = #tpu.dot_dimension_numbers<[1], [0], [0], [1], [0, 0, 1, 1], [], []>} : vector<8x64xbf16>, vector<64x8xbf16>, vector<8x8xf32> -> vector<8x8xf32>
    %29 = vector.broadcast %26 : vector<1x8xf32> to vector<8x8xf32>
    %30 = arith.addf %28, %29 : vector<8x8xf32>
    %31 = tpu.iota {dimensions = array<i32: 1>} : vector<8x8xi32>
    %c4_i32 = arith.constant 4 : i32
    %32 = vector.broadcast %c4_i32 : i32 to vector<8x8xi32>
    %33 = arith.cmpi slt, %31, %32 : vector<8x8xi32>
    %cst_23 = arith.constant 0.000000e+00 : f32
    %34 = vector.broadcast %cst_23 : f32 to vector<8x8xf32>
    %35 = arith.maximumf %30, %34 : vector<8x8xf32>
    %36 = math.absf %30 : vector<8x8xf32>
    %cst_24 = arith.constant 0.000000e+00 : f32
    %37 = vector.broadcast %cst_24 : f32 to vector<8x8xf32>
    %38 = arith.subf %37, %36 : vector<8x8xf32>
    %39 = math.exp %38 : vector<8x8xf32>
    %40 = math.log1p %39 : vector<8x8xf32>
    %41 = arith.addf %35, %40 : vector<8x8xf32>
    %cst_25 = arith.constant 1.000000e+00 : f32
    %42 = vector.broadcast %cst_25 : f32 to vector<8x8xf32>
    %43 = arith.addf %41, %42 : vector<8x8xf32>
    %44 = arith.select %33, %43, %30 : vector<8x8xi1>, vector<8x8xf32>
    %c0_26 = arith.constant 0 : index
    %c0_27 = arith.constant 0 : index
    %45 = vector.load %arg9[%c0_26, %c0_27] : memref<8x8xf32, #tpu.memory_space<vmem>>, vector<8x8xf32>
    tpu.vector_store %arg9[%c0_26, %c0_27], %44 {strides = array<i32>} : memref<8x8xf32, #tpu.memory_space<vmem>>, vector<8x8xf32>,
    return
  }
}

</mosaic_0001>

<llo_original>
// kernel: evaluate.1
$region0: #{evaluate.1}
  #allocation0 [shape = 'u32[]', space=smem, size = 0x4, offset = 0x4, fixed_abs, tag = 'smem constant byte address 0x4 - core index']
  #allocation1 [shape = 'u32[144,128]{1,0:T(1,128)}', space=vmem, size = 0x12000, scoped, tag = 'internal scratch']
  %s0 = inlined_call_operand.vmem [shape: f32[8,8], index: 0, kind: input, shape index: {}]
  %s1 = inlined_call_operand.vmem [shape: bf16[8,64], index: 1, kind: input, shape index: {}]
  %s2 = inlined_call_operand.vmem [shape: f32[1,64], index: 2, kind: input, shape index: {}]
  %s3 = inlined_call_operand.vmem [shape: bf16[64,64], index: 3, kind: input, shape index: {}]
  %s4 = inlined_call_operand.vmem [shape: f32[1,64], index: 4, kind: input, shape index: {}]
  %s5 = inlined_call_operand.vmem [shape: bf16[64,64], index: 5, kind: input, shape index: {}]
  %s6 = inlined_call_operand.vmem [shape: f32[1,64], index: 6, kind: input, shape index: {}]
  %s7 = inlined_call_operand.vmem [shape: bf16[64,8], index: 7, kind: input, shape index: {}]
  %s8 = inlined_call_operand.vmem [shape: f32[1,8], index: 8, kind: input, shape index: {}]
  %s9 = inlined_call_operand.vmem [shape: f32[8,8], index: 9, kind: output, shape index: {}]
  %s10 = sld [smem:[#allocation0]]
  $region46: #{evaluate.1} parent=0
    _
  %s12 = ssub.s32 1, %s10
  %s13 = scalar_select 0, %s12, %s10
  // Predicated region
  $region2: #{evaluate.1} parent=0 // pred_check
    _
  $region3: #{evaluate.1} parent=0 // pred_check_branch
    %15 = sbr.rel (0) target = $region5
  $region4: #{evaluate.1} parent=0 // pred_region
    _
  $region5: #{evaluate.1} parent=0 // pred_fallthru
    _
  // Predicated region
  $region6: #{evaluate.1} parent=0 // pred_check
    _
  $region7: #{evaluate.1} parent=0 // pred_check_branch
    %17 = sbr.rel (0) target = $region9
  $region8: #{evaluate.1} parent=0 // pred_region
    _
  $region9: #{evaluate.1} parent=0 // pred_fallthru
    _
  // Predicated region
  $region10: #{evaluate.1} parent=0 // pred_check
    _
  $region11: #{evaluate.1} parent=0 // pred_check_branch
    %19 = sbr.rel (0) target = $region13
  $region12: #{evaluate.1} parent=0 // pred_region
    _
  $region13: #{evaluate.1} parent=0 // pred_fallthru
    _
  // Predicated region
  $region14: #{evaluate.1} parent=0 // pred_check
    _
  $region15: #{evaluate.1} parent=0 // pred_check_branch
    %21 = sbr.rel (0) target = $region17
  $region16: #{evaluate.1} parent=0 // pred_region
    _
  $region17: #{evaluate.1} parent=0 // pred_fallthru
    _
  // Predicated region
  $region18: #{evaluate.1} parent=0 // pred_check
    _
  $region19: #{evaluate.1} parent=0 // pred_check_branch
    %23 = sbr.rel (0) target = $region21
  $region20: #{evaluate.1} parent=0 // pred_region
    _
  $region21: #{evaluate.1} parent=0 // pred_fallthru
    _
  // Predicated region
  $region22: #{evaluate.1} parent=0 // pred_check
    _
  $region23: #{evaluate.1} parent=0 // pred_check_branch
    %25 = sbr.rel (0) target = $region25
  $region24: #{evaluate.1} parent=0 // pred_region
    _
  $region25: #{evaluate.1} parent=0 // pred_fallthru
    _
  // Predicated region
  $region26: #{evaluate.1} parent=0 // pred_check
    _
  $region27: #{evaluate.1} parent=0 // pred_check_branch
    %27 = sbr.rel (0) target = $region29
  $region28: #{evaluate.1} parent=0 // pred_region
    _
  $region29: #{evaluate.1} parent=0 // pred_fallthru
    _
  // Predicated region
  $region30: #{evaluate.1} parent=0 // pred_check
    _
  $region31: #{evaluate.1} parent=0 // pred_check_branch
    %29 = sbr.rel (0) target = $region33
  $region32: #{evaluate.1} parent=0 // pred_region
    _
  $region33: #{evaluate.1} parent=0 // pred_fallthru
    _
  // Predicated region
  $region34: #{evaluate.1} parent=0 // pred_check
    _
  $region35: #{evaluate.1} parent=0 // pred_check_branch
    %31 = sbr.rel (0) target = $region37
  $region36: #{evaluate.1} parent=0 // pred_region
    _
  $region37: #{evaluate.1} parent=0 // pred_fallthru
    _
  %v33 = vld [vmem:[%s0] sm:$0xff]
  %v34 = vld [vmem:[%s1] sm:$0xf]
  %v35 = vld [vmem:[%s2] sm:$0x1]
  %v36 = vpack.c.bf16 %v33, %v33
  %v38 = vlaneseq
  %v39 = vshrl.u32 %v38, 7
  %v40 = vsub.s32 0, %v39
  %v41 = vrot.slane %v35, %v40
  %vm43 = vcmask 64512
  %v45 = vsel %vm43, %v36, 0
  %vm47 = vcmask 1043456
  %v49 = vsel %vm47, %v34, 0
  %51 = vmatprep.subr.bf16.mxu0 0
  %52 = vmatpush1.bf16.msra.mxu0 %v49
  %53 = vmatprep.subr.bf16.mxu0 0
  %54 = vmatpush1.bf16.msra.mxu0 0
  %55 = vmatprep.subr.bf16.mxu0 0
  %56 = vmatpush1.bf16.msra.mxu0 0
  %57 = vmatprep.subr.bf16.mxu0 0
  %58 = vmatpush1.bf16.msra.mxu0 0
  %59 = vmatprep.subr.bf16.mxu0 0
  %60 = vmatpush1.bf16.msra.mxu0 0
  %61 = vmatprep.subr.bf16.mxu0 0
  %62 = vmatpush1.bf16.msra.mxu0 0
  %63 = vmatprep.subr.bf16.mxu0 0
  %64 = vmatpush1.bf16.msra.mxu0 0
  %65 = vmatprep.subr.bf16.mxu0 0
  %66 = vmatpush1.bf16.msra.mxu0 0
  %67 = vmatprep.subr.bf16.mxu0 0
  %68 = vmatpush1.bf16.msra.mxu0 0
  %69 = vmatprep.subr.bf16.mxu0 0
  %70 = vmatpush1.bf16.msra.mxu0 0
  %71 = vmatprep.subr.bf16.mxu0 0
  %72 = vmatpush1.bf16.msra.mxu0 0
  %73 = vmatprep.subr.bf16.mxu0 0
  %74 = vmatpush1.bf16.msra.mxu0 0
  %75 = vmatprep.subr.bf16.mxu0 0
  %76 = vmatpush1.bf16.msra.mxu0 0
  %77 = vmatprep.subr.bf16.mxu0 0
  %78 = vmatpush1.bf16.msra.mxu0 0
  %79 = vmatprep.subr.bf16.mxu0 0
  %80 = vmatpush1.bf16.msra.mxu0 0
  %81 = vmatprep.subr.bf16.mxu0 0
  %82 = vmatpush1.bf16.msra.mxu0 0
  %83 = vmatprep.mubr.bf16.mxu0 0
  %84 = vmatmul.mubr.bf16.gmra.mrb[0].mxu0 %v45
  %v85 = vpop.f32.mrb[0].mxu0
  %v86 = vadd.f32 %v41, %v85
  %v87 = vpop.f32.mrb[0].mxu0
  %v88 = vpop.f32.mrb[0].mxu0
  %v89 = vpop.f32.mrb[0].mxu0
  %90 = vdwg.mxu0
  %v91 = vmax.f32 %v86, 0.0
  %v92 = vld [vmem:[%s3] sm:$0xf]
  %v93 = vld [vmem:[%s3 + $0x4] sm:$0xf]
  %v94 = vld [vmem:[%s3 + $0x8] sm:$0xf]
  %v95 = vld [vmem:[%s3 + $0xc] sm:$0xf]
  %v96 = vld [vmem:[%s3 + $0x10] sm:$0xf]
  %v97 = vld [vmem:[%s3 + $0x14] sm:$0xf]
  %v98 = vld [vmem:[%s3 + $0x18] sm:$0xf]
  %v99 = vld [vmem:[%s3 + $0x1c] sm:$0xf]
  %v100 = vld [vmem:[%s4] sm:$0x1]
  %v101 = vpack.c.bf16 %v91, %v91
  %v103 = vlaneseq
  %v104 = vshrl.u32 %v103, 7
  %v105 = vsub.s32 0, %v104
  %v106 = vrot.slane %v100, %v105
  %v116 = vunpack.c.l.b16 %v92
  %v117 = vunpack.c.l.b16 %v93
  %v118 = vunpack.c.l.b16 %v94
  %v119 = vunpack.c.l.b16 %v95
  %v120 = vunpack.c.l.b16 %v96
  %v121 = vunpack.c.l.b16 %v97
  %v122 = vunpack.c.l.b16 %v98
  %v123 = vunpack.c.l.b16 %v99
  %v124 = vpack.c.b16 %v117, %v116
  %v125 = vpack.c.b16 %v119, %v118
  %v126 = vpack.c.b16 %v121, %v120
  %v127 = vpack.c.b16 %v123, %v122
  %vm132 = vcmask 523264
  %v134 = vsel %vm132, %v101, 0
  %136 = vmatprep.subr.bf16.mxu0 0
  %137 = vmatpush1.bf16.msra.mxu0 %v124
  %138 = vmatprep.subr.bf16.mxu0 0
  %139 = vmatpush1.bf16.msra.mxu0 %v125
  %140 = vmatprep.subr.bf16.mxu0 0
  %141 = vmatpush1.bf16.msra.mxu0 %v126
  %142 = vmatprep.subr.bf16.mxu0 0
  %143 = vmatpush1.bf16.msra.mxu0 %v127
  %144 = vmatprep.subr.bf16.mxu0 0
  %145 = vmatpush1.bf16.msra.mxu0 0
  %146 = vmatprep.subr.bf16.mxu0 0
  %147 = vmatpush1.bf16.msra.mxu0 0
  %148 = vmatprep.subr.bf16.mxu0 0
  %149 = vmatpush1.bf16.msra.mxu0 0
  %150 = vmatprep.subr.bf16.mxu0 0
  %151 = vmatpush1.bf16.msra.mxu0 0
  %152 = vmatprep.subr.bf16.mxu0 0
  %153 = vmatpush1.bf16.msra.mxu0 0
  %154 = vmatprep.subr.bf16.mxu0 0
  %155 = vmatpush1.bf16.msra.mxu0 0
  %156 = vmatprep.subr.bf16.mxu0 0
  %157 = vmatpush1.bf16.msra.mxu0 0
  %158 = vmatprep.subr.bf16.mxu0 0
  %159 = vmatpush1.bf16.msra.mxu0 0
  %160 = vmatprep.subr.bf16.mxu0 0
  %161 = vmatpush1.bf16.msra.mxu0 0
  %162 = vmatprep.subr.bf16.mxu0 0
  %163 = vmatpush1.bf16.msra.mxu0 0
  %164 = vmatprep.subr.bf16.mxu0 0
  %165 = vmatpush1.bf16.msra.mxu0 0
  %166 = vmatprep.subr.bf16.mxu0 0
  %167 = vmatpush1.bf16.msra.mxu0 0
  %168 = vmatprep.mubr.bf16.mxu0 0
  %169 = vmatmul.mubr.bf16.gmra.mrb[0].mxu0 %v134
  %v170 = vpop.f32.mrb[0].mxu0
  %v171 = vadd.f32 %v106, %v170
  %v172 = vpop.f32.mrb[0].mxu0
  %v173 = vpop.f32.mrb[0].mxu0
  %v174 = vpop.f32.mrb[0].mxu0
  %175 = vdwg.mxu0
  %v176 = vmax.f32 %v171, 0.0
  %v177 = vld [vmem:[%s5] sm:$0xf]
  %v178 = vld [vmem:[%s5 + $0x4] sm:$0xf]
  %v179 = vld [vmem:[%s5 + $0x8] sm:$0xf]
  %v180 = vld [vmem:[%s5 + $0xc] sm:$0xf]
  %v181 = vld [vmem:[%s5 + $0x10] sm:$0xf]
  %v182 = vld [vmem:[%s5 + $0x14] sm:$0xf]
  %v183 = vld [vmem:[%s5 + $0x18] sm:$0xf]
  %v184 = vld [vmem:[%s5 + $0x1c] sm:$0xf]
  %v185 = vld [vmem:[%s6] sm:$0x1]
  %v186 = vpack.c.bf16 %v176, %v176
  %v188 = vlaneseq
  %v189 = vshrl.u32 %v188, 7
  %v190 = vsub.s32 0, %v189
  %v191 = vrot.slane %v185, %v190
  %v201 = vunpack.c.l.b16 %v177
  %v202 = vunpack.c.l.b16 %v178
  %v203 = vunpack.c.l.b16 %v179
  %v204 = vunpack.c.l.b16 %v180
  %v205 = vunpack.c.l.b16 %v181
  %v206 = vunpack.c.l.b16 %v182
  %v207 = vunpack.c.l.b16 %v183
  %v208 = vunpack.c.l.b16 %v184
  %v209 = vpack.c.b16 %v202, %v201
  %v210 = vpack.c.b16 %v204, %v203
  %v211 = vpack.c.b16 %v206, %v205
  %v212 = vpack.c.b16 %v208, %v207
  %v218 = vsel %vm132, %v186, 0
  %220 = vmatprep.subr.bf16.mxu0 0
  %221 = vmatpush1.bf16.msra.mxu0 %v209
  %222 = vmatprep.subr.bf16.mxu0 0
  %223 = vmatpush1.bf16.msra.mxu0 %v210
  %224 = vmatprep.subr.bf16.mxu0 0
  %225 = vmatpush1.bf16.msra.mxu0 %v211
  %226 = vmatprep.subr.bf16.mxu0 0
  %227 = vmatpush1.bf16.msra.mxu0 %v212
  %228 = vmatprep.subr.bf16.mxu0 0
  %229 = vmatpush1.bf16.msra.mxu0 0
  %230 = vmatprep.subr.bf16.mxu0 0
  %231 = vmatpush1.bf16.msra.mxu0 0
  %232 = vmatprep.subr.bf16.mxu0 0
  %233 = vmatpush1.bf16.msra.mxu0 0
  %234 = vmatprep.subr.bf16.mxu0 0
  %235 = vmatpush1.bf16.msra.mxu0 0
  %236 = vmatprep.subr.bf16.mxu0 0
  %237 = vmatpush1.bf16.msra.mxu0 0
  %238 = vmatprep.subr.bf16.mxu0 0
  %239 = vmatpush1.bf16.msra.mxu0 0
  %240 = vmatprep.subr.bf16.mxu0 0
  %241 = vmatpush1.bf16.msra.mxu0 0
  %242 = vmatprep.subr.bf16.mxu0 0
  %243 = vmatpush1.bf16.msra.mxu0 0
  %244 = vmatprep.subr.bf16.mxu0 0
  %245 = vmatpush1.bf16.msra.mxu0 0
  %246 = vmatprep.subr.bf16.mxu0 0
  %247 = vmatpush1.bf16.msra.mxu0 0
  %248 = vmatprep.subr.bf16.mxu0 0
  %249 = vmatpush1.bf16.msra.mxu0 0
  %250 = vmatprep.subr.bf16.mxu0 0
  %251 = vmatpush1.bf16.msra.mxu0 0
  %252 = vmatprep.mubr.bf16.mxu0 0
  %253 = vmatmul.mubr.bf16.gmra.mrb[0].mxu0 %v218
  %v254 = vpop.f32.mrb[0].mxu0
  %v255 = vadd.f32 %v191, %v254
  %v256 = vpop.f32.mrb[0].mxu0
  %v257 = vpop.f32.mrb[0].mxu0
  %v258 = vpop.f32.mrb[0].mxu0
  %259 = vdwg.mxu0
  %v260 = vmax.f32 %v255, 0.0
  %v261 = vld [vmem:[%s7] sm:$0xf]
  %v262 = vld [vmem:[%s7 + $0x4] sm:$0xf]
  %v263 = vld [vmem:[%s7 + $0x8] sm:$0xf]
  %v264 = vld [vmem:[%s7 + $0xc] sm:$0xf]
  %v265 = vld [vmem:[%s7 + $0x10] sm:$0xf]
  %v266 = vld [vmem:[%s7 + $0x14] sm:$0xf]
  %v267 = vld [vmem:[%s7 + $0x18] sm:$0xf]
  %v268 = vld [vmem:[%s7 + $0x1c] sm:$0xf]
  %v269 = vld [vmem:[%s8] sm:$0x1]
  %v270 = vpack.c.bf16 %v260, %v260
  %v272 = vlaneseq
  %v273 = vshrl.u32 %v272, 7
  %v274 = vsub.s32 0, %v273
  %v275 = vrot.slane %v269, %v274
  %v285 = vunpack.c.l.b16 %v261
  %v286 = vunpack.c.l.b16 %v262
  %v287 = vunpack.c.l.b16 %v263
  %v288 = vunpack.c.l.b16 %v264
  %v289 = vunpack.c.l.b16 %v265
  %v290 = vunpack.c.l.b16 %v266
  %v291 = vunpack.c.l.b16 %v267
  %v292 = vunpack.c.l.b16 %v268
  %v293 = vpack.c.b16 %v286, %v285
  %v294 = vpack.c.b16 %v288, %v287
  %v295 = vpack.c.b16 %v290, %v289
  %v296 = vpack.c.b16 %v292, %v291
  %v302 = vsel %vm132, %v270, 0
  %304 = vmatprep.subr.bf16.mxu0 0
  %305 = vmatpush1.bf16.msra.mxu0 %v293
  %306 = vmatprep.subr.bf16.mxu0 0
  %307 = vmatpush1.bf16.msra.mxu0 %v294
  %308 = vmatprep.subr.bf16.mxu0 0
  %309 = vmatpush1.bf16.msra.mxu0 %v295
  %310 = vmatprep.subr.bf16.mxu0 0
  %311 = vmatpush1.bf16.msra.mxu0 %v296
  %312 = vmatprep.subr.bf16.mxu0 0
  %313 = vmatpush1.bf16.msra.mxu0 0
  %314 = vmatprep.subr.bf16.mxu0 0
  %315 = vmatpush1.bf16.msra.mxu0 0
  %316 = vmatprep.subr.bf16.mxu0 0
  %317 = vmatpush1.bf16.msra.mxu0 0
  %318 = vmatprep.subr.bf16.mxu0 0
  %319 = vmatpush1.bf16.msra.mxu0 0
  %320 = vmatprep.subr.bf16.mxu0 0
  %321 = vmatpush1.bf16.msra.mxu0 0
  %322 = vmatprep.subr.bf16.mxu0 0
  %323 = vmatpush1.bf16.msra.mxu0 0
  %324 = vmatprep.subr.bf16.mxu0 0
  %325 = vmatpush1.bf16.msra.mxu0 0
  %326 = vmatprep.subr.bf16.mxu0 0
  %327 = vmatpush1.bf16.msra.mxu0 0
  %328 = vmatprep.subr.bf16.mxu0 0
  %329 = vmatpush1.bf16.msra.mxu0 0
  %330 = vmatprep.subr.bf16.mxu0 0
  %331 = vmatpush1.bf16.msra.mxu0 0
  %332 = vmatprep.subr.bf16.mxu0 0
  %333 = vmatpush1.bf16.msra.mxu0 0
  %334 = vmatprep.subr.bf16.mxu0 0
  %335 = vmatpush1.bf16.msra.mxu0 0
  %336 = vmatprep.mubr.bf16.mxu0 0
  %337 = vmatmul.mubr.bf16.gmra.mrb[0].mxu0 %v302
  %v338 = vpop.f32.mrb[0].mxu0
  %v339 = vadd.f32 %v275, %v338
  %v340 = vpop.f32.mrb[0].mxu0
  %v341 = vpop.f32.mrb[0].mxu0
  %v342 = vpop.f32.mrb[0].mxu0
  %343 = vdwg.mxu0
  %v344 = vlaneseq
  %v345 = vand.u32 %v344, 127
  %vm346 = vcmp.lt.s32.totalorder %v345, 4
  %v347 = vmax.f32 %v339, 0.0
  %v348 = vand.u32 2147483647, %v339
  %v349 = vsub.f32 0.0, %v348
  %v350 = vmul.f32 %v349, 1.442695
  %v351 = vpow.pop %v350
  %v352 = vadd.f32 %v351, 1.0
  %v353 = vlog2.pop %v352
  %v354 = vmul.f32 %v353, 0.6931472
  %v355 = vmul.f32 -0.5, %v351
  %v356 = vadd.f32 %v355, 1.0
  %v357 = vmul.f32 %v356, %v351
  %v358 = vand.u32 2147483647, %v351
  %vm359 = vcmp.lt.f32.partialorder %v358, 0.0004427343
  %v360 = vsel %vm359, %v357, %v354
  %v361 = vadd.f32 %v347, %v360
  %v362 = vadd.f32 %v361, 1.0
  %v363 = vsel %vm346, %v362, %v339
  %364 = vst.msk [vmem:[%s9] sm:$0xff] %vm43, %v363
  // Predicated region
  $region38: #{evaluate.1} parent=0 // pred_check
    _
  $region39: #{evaluate.1} parent=0 // pred_check_branch
    %366 = sbr.rel (0) target = $region41
  $region40: #{evaluate.1} parent=0 // pred_region
    _
  $region41: #{evaluate.1} parent=0 // pred_fallthru
    _
  // Predicated region
  $region42: #{evaluate.1} parent=0 // pred_check
    _
  $region43: #{evaluate.1} parent=0 // pred_check_branch
    %368 = sbr.rel (0) target = $region45
  $region44: #{evaluate.1} parent=0 // pred_region
    _
  $region45: #{evaluate.1} parent=0 // pred_fallthru
    _

</llo_original>
